<compile_context>
chip_gen: v6e
topology: v6e:2x2x1
jax: 0.10.0
libtpu: 0.0.40
codegen_flags: <defaults>
</compile_context>

<pallas_src>
import functools

import jax
import jax.numpy as jnp
from jax.experimental import pallas as pl
from jax.experimental.pallas import tpu as pltpu


def _round_up(x, k):
    return ((x + k - 1) // k) * k


# --------------------------------------------------------------------------
# Pallas kernel: one (TILE_N, M_pad) slab of the matching cost matrix per step.
# --------------------------------------------------------------------------
def _matcher_cost_kernel(logits_ref, onehot_ref, out_bbox_ref, tgt_bbox_t_ref,
                         cost_ref, cost_class_ref,
                         *, alpha, gamma, w_class, w_bbox, w_giou):
    logits = logits_ref[...]            # (TILE_N, C_pad)
    onehot = onehot_ref[...]            # (C_pad, M_pad)  one-hot columns for tgt_ids
    ob = out_bbox_ref[...]              # (TILE_N, 4)     cxcywh predictions
    tbt = tgt_bbox_t_ref[...]           # (4, M_pad)      cxcywh targets (transposed)

    # ---------------- focal-style classification cost ----------------
    prob = jax.nn.sigmoid(logits)
    log_p = jnp.log(prob + 1e-8)
    log_1mp = log_p - logits            # log(1 - sigmoid(x)) = log(sigmoid(x)) - x
    one_m = 1.0 - prob
    if gamma == 2.0:                    # module default; avoids pow lowering
        prob_g = prob * prob
        one_m_g = one_m * one_m
    else:
        prob_g = prob ** gamma
        one_m_g = one_m ** gamma
    neg_cost = (1.0 - alpha) * prob_g * (-log_1mp)
    pos_cost = alpha * one_m_g * (-log_p)
    # gather over target class ids == exact one-hot matmul (MXU)
    cost_class = jnp.dot(pos_cost - neg_cost, onehot,
                         preferred_element_type=jnp.float32)      # (TILE_N, M_pad)

    # ---------------- pairwise box terms: (N,1) vs (1,M) --------------
    cx_o, cy_o, w_o, h_o = ob[:, 0:1], ob[:, 1:2], ob[:, 2:3], ob[:, 3:4]
    cx_t, cy_t, w_t, h_t = tbt[0:1, :], tbt[1:2, :], tbt[2:3, :], tbt[3:4, :]

    # L1 cost (torch.cdist, p=1) on raw cxcywh coordinates
    cost_bbox = (jnp.abs(cx_o - cx_t) + jnp.abs(cy_o - cy_t)
                 + jnp.abs(w_o - w_t) + jnp.abs(h_o - h_t))       # (TILE_N, M_pad)

    # cxcywh -> xyxy
    x0_o, y0_o = cx_o - 0.5 * w_o, cy_o - 0.5 * h_o
    x1_o, y1_o = cx_o + 0.5 * w_o, cy_o + 0.5 * h_o
    x0_t, y0_t = cx_t - 0.5 * w_t, cy_t - 0.5 * h_t
    x1_t, y1_t = cx_t + 0.5 * w_t, cy_t + 0.5 * h_t

    area_o = (x1_o - x0_o) * (y1_o - y0_o)                        # (TILE_N, 1)
    area_t = (x1_t - x0_t) * (y1_t - y0_t)                        # (1, M_pad)

    iw = jnp.maximum(jnp.minimum(x1_o, x1_t) - jnp.maximum(x0_o, x0_t), 0.0)
    ih = jnp.maximum(jnp.minimum(y1_o, y1_t) - jnp.maximum(y0_o, y0_t), 0.0)
    inter = iw * ih
    union = area_o + area_t - inter
    iou = inter * pl.reciprocal(union, approx=False)              # EUP, not VALU divide

    ew = jnp.maximum(jnp.maximum(x1_o, x1_t) - jnp.minimum(x0_o, x0_t), 0.0)
    eh = jnp.maximum(jnp.maximum(y1_o, y1_t) - jnp.minimum(y0_o, y0_t), 0.0)
    enclose = ew * eh
    giou = iou - (enclose - union) * pl.reciprocal(enclose, approx=False)
    cost_giou = -giou                                             # (TILE_N, M_pad)

    cost_ref[...] = (w_bbox * cost_bbox
                     + w_class * cost_class
                     + w_giou * cost_giou)
    cost_class_ref[...] = cost_class


# --------------------------------------------------------------------------
# Wrapper: flatten, pad to lane-dense shapes, tile over N, slice the pads off.
# --------------------------------------------------------------------------
def hungarian_matcher_cost(pred_logits, pred_boxes, tgt_ids, tgt_bbox,
                           cost_class=1.0, cost_bbox=1.0, cost_giou=1.0,
                           alpha=0.25, gamma=2.0, tile_n=256):
    bs, nq, nc = pred_logits.shape
    n = bs * nq
    m = int(tgt_ids.shape[0])

    nc_pad = _round_up(nc, 128)                    # MXU K alignment
    m_pad = _round_up(max(m, 1), 128)              # lane-dense output axis
    tile_n = _round_up(max(8, min(int(tile_n), _round_up(n, 8))), 8)
    n_pad = _round_up(n, tile_n)

    dummy_box = jnp.array([0.5, 0.5, 1.0, 1.0], jnp.float32)  # valid box -> finite GIoU

    logits = pred_logits.reshape(n, nc).astype(jnp.float32)
    logits = jnp.pad(logits, ((0, n_pad - n), (0, nc_pad - nc)))

    out_bbox = pred_boxes.reshape(n, 4).astype(jnp.float32)
    if n_pad > n:
        out_bbox = jnp.concatenate(
            [out_bbox, jnp.broadcast_to(dummy_box, (n_pad - n, 4))], axis=0)

    onehot_t = jax.nn.one_hot(tgt_ids, nc_pad, dtype=jnp.float32).T   # (nc_pad, m)
    onehot_t = jnp.pad(onehot_t, ((0, 0), (0, m_pad - m)))            # zero pad columns

    tgt_bbox_f = tgt_bbox.astype(jnp.float32)
    if m_pad > m:
        tgt_bbox_f = jnp.concatenate(
            [tgt_bbox_f, jnp.broadcast_to(dummy_box, (m_pad - m, 4))], axis=0)
    tgt_bbox_t = tgt_bbox_f.T                                         # (4, m_pad)

    kernel = functools.partial(_matcher_cost_kernel,
                               alpha=float(alpha), gamma=float(gamma),
                               w_class=float(cost_class),
                               w_bbox=float(cost_bbox),
                               w_giou=float(cost_giou))

    grid = (n_pad // tile_n,)
    c, c_class = pl.pallas_call(
        kernel,
        out_shape=(jax.ShapeDtypeStruct((n_pad, m_pad), jnp.float32),
                   jax.ShapeDtypeStruct((n_pad, m_pad), jnp.float32)),
        grid=grid,
        in_specs=[pl.BlockSpec((tile_n, nc_pad), lambda i: (i, 0)),   # logits tile
                  pl.BlockSpec((nc_pad, m_pad), lambda i: (0, 0)),    # onehot, resident
                  pl.BlockSpec((tile_n, 4), lambda i: (i, 0)),        # pred boxes tile
                  pl.BlockSpec((4, m_pad), lambda i: (0, 0))],        # tgt boxes, resident
        out_specs=(pl.BlockSpec((tile_n, m_pad), lambda i: (i, 0)),
                   pl.BlockSpec((tile_n, m_pad), lambda i: (i, 0))),
        compiler_params=pltpu.CompilerParams(
            dimension_semantics=("parallel",)),
    )(logits, onehot_t, out_bbox, tgt_bbox_t)

    c = c[:n, :m].reshape(bs, nq, m)
    c_class = c_class[:n, :m].reshape(bs, nq, m)
    return c, c_class


# --------------------------------------------------------------------------
# Pure-JAX reference (mirrors the PyTorch forward, minus linear_sum_assignment)
# --------------------------------------------------------------------------
def _reference_cost(pred_logits, pred_boxes, tgt_ids, tgt_bbox,
                    cost_class=1.0, cost_bbox=1.0, cost_giou=1.0,
                    alpha=0.25, gamma=2.0):
    bs, nq, nc = pred_logits.shape
    out_prob = jax.nn.sigmoid(pred_logits.reshape(-1, nc))
    out_bbox = pred_boxes.reshape(-1, 4)

    neg = (1 - alpha) * out_prob ** gamma * -jnp.log(1 - out_prob + 1e-8)
    pos = alpha * (1 - out_prob) ** gamma * -jnp.log(out_prob + 1e-8)
    c_class = pos[:, tgt_ids] - neg[:, tgt_ids]

    c_bbox = jnp.sum(jnp.abs(out_bbox[:, None, :] - tgt_bbox[None, :, :]), axis=-1)

    def to_xyxy(b):
        cx, cy, w, h = b[:, 0], b[:, 1], b[:, 2], b[:, 3]
        return jnp.stack([cx - 0.5 * w, cy - 0.5 * h, cx + 0.5 * w, cy + 0.5 * h], -1)

    b1, b2 = to_xyxy(out_bbox), to_xyxy(tgt_bbox)
    a1 = (b1[:, 2] - b1[:, 0]) * (b1[:, 3] - b1[:, 1])
    a2 = (b2[:, 2] - b2[:, 0]) * (b2[:, 3] - b2[:, 1])
    lt = jnp.maximum(b1[:, None, :2], b2[None, :, :2])
    rb = jnp.minimum(b1[:, None, 2:], b2[None, :, 2:])
    wh = jnp.clip(rb - lt, 0)
    inter = wh[..., 0] * wh[..., 1]
    union = a1[:, None] + a2[None, :] - inter
    iou = inter / union
    lt_e = jnp.minimum(b1[:, None, :2], b2[None, :, :2])
    rb_e = jnp.maximum(b1[:, None, 2:], b2[None, :, 2:])
    wh_e = jnp.clip(rb_e - lt_e, 0)
    enc = wh_e[..., 0] * wh_e[..., 1]
    giou = iou - (enc - union) / enc

    c = cost_bbox * c_bbox + cost_class * c_class + cost_giou * (-giou)
    m = tgt_ids.shape[0]
    return c.reshape(bs, nq, m), c_class.reshape(bs, nq, m)


if __name__ == "__main__":
    key = jax.random.PRNGKey(0)
    bs, num_queries, num_classes = 2, 8, 32
    sizes = [3, 5]                       # per-image target counts
    m_total = sum(sizes)

    k1, k2, k3, k4, k5 = jax.random.split(key, 5)
    pred_logits = jax.random.normal(k1, (bs, num_queries, num_classes), jnp.float32)
    # predicted boxes: cxcywh in (0, 1)
    pred_cxcy = jax.random.uniform(k2, (bs, num_queries, 2), minval=0.2, maxval=0.8)
    pred_wh = jax.random.uniform(k3, (bs, num_queries, 2), minval=0.05, maxval=0.3)
    pred_boxes = jnp.concatenate([pred_cxcy, pred_wh], axis=-1).astype(jnp.float32)
    # concatenated targets (as in torch.cat over the batch)
    tgt_ids = jax.random.randint(k4, (m_total,), 0, num_classes, dtype=jnp.int32)
    tgt_cxcy = jax.random.uniform(k5, (m_total, 2), minval=0.2, maxval=0.8)
    tgt_wh = jax.random.uniform(jax.random.fold_in(k5, 1), (m_total, 2),
                                minval=0.05, maxval=0.3)
    tgt_bbox = jnp.concatenate([tgt_cxcy, tgt_wh], axis=-1).astype(jnp.float32)

    # tile_n=8 exercises the multi-step grid even at this tiny N (= 16)
    C, C_class = hungarian_matcher_cost(pred_logits, pred_boxes, tgt_ids, tgt_bbox,
                                        tile_n=8)
    C = jax.block_until_ready(C)
    C_class = jax.block_until_ready(C_class)

    C_ref, C_class_ref = _reference_cost(pred_logits, pred_boxes, tgt_ids, tgt_bbox)
    assert C.shape == (bs, num_queries, m_total)
    assert jnp.allclose(C, C_ref, rtol=1e-4, atol=1e-4)
    assert jnp.allclose(C_class, C_class_ref, rtol=1e-4, atol=1e-4)

    # TODO(synk): per-image linear_sum_assignment over C.split(sizes, -1) stays on host.
    print("KERNEL_OK")
</pallas_src>

<mosaic_0001>
module attributes {stable_mosaic.version = 11 : i64} {
  func.func @_matcher_cost_kernel(%arg0: i32, %arg1: memref<8x128xf32, #tpu.memory_space<vmem>>, %arg2: memref<128x128xf32, #tpu.memory_space<vmem>>, %arg3: memref<8x4xf32, #tpu.memory_space<vmem>>, %arg4: memref<4x128xf32, #tpu.memory_space<vmem>>, %arg5: memref<8x128xf32, #tpu.memory_space<vmem>>, %arg6: memref<8x128xf32, #tpu.memory_space<vmem>>) attributes {dimension_semantics = [#tpu.dimension_semantics<parallel>], iteration_bounds = array<i64: 2>, scalar_prefetch = 0 : i64, scratch_operands = 0 : i64, tpu.core_type = #tpu.core_type<tc>, window_params = [{transform_indices = @transform_0, window_bounds = array<i64: 8, 128>}, {pipeline_mode = #tpu.pipeline_mode<synchronous>, transform_indices = @transform_1, window_bounds = array<i64: 128, 128>}, {transform_indices = @transform_2, window_bounds = array<i64: 8, 4>}, {pipeline_mode = #tpu.pipeline_mode<synchronous>, transform_indices = @transform_3, window_bounds = array<i64: 4, 128>}, {transform_indices = @transform_4, window_bounds = array<i64: 8, 128>}, {transform_indices = @transform_5, window_bounds = array<i64: 8, 128>}]} {
    %c0 = arith.constant 0 : index
    %c0_0 = arith.constant 0 : index
    %0 = vector.load %arg1[%c0, %c0_0] : memref<8x128xf32, #tpu.memory_space<vmem>>, vector<8x128xf32>
    %c0_1 = arith.constant 0 : index
    %c0_2 = arith.constant 0 : index
    %1 = vector.load %arg2[%c0_1, %c0_2] : memref<128x128xf32, #tpu.memory_space<vmem>>, vector<128x128xf32>
    %c0_3 = arith.constant 0 : index
    %c0_4 = arith.constant 0 : index
    %2 = vector.load %arg3[%c0_3, %c0_4] : memref<8x4xf32, #tpu.memory_space<vmem>>, vector<8x4xf32>
    %c0_5 = arith.constant 0 : index
    %c0_6 = arith.constant 0 : index
    %3 = vector.load %arg4[%c0_5, %c0_6] : memref<4x128xf32, #tpu.memory_space<vmem>>, vector<4x128xf32>
    %4 = arith.negf %0 : vector<8x128xf32>
    %5 = math.exp %4 : vector<8x128xf32>
    %cst = arith.constant 1.000000e+00 : f32
    %6 = vector.broadcast %cst : f32 to vector<8x128xf32>
    %7 = arith.addf %6, %5 : vector<8x128xf32>
    %8 = arith.divf %6, %7 : vector<8x128xf32>
    %cst_7 = arith.constant 9.99999993E-9 : f32
    %9 = vector.broadcast %cst_7 : f32 to vector<8x128xf32>
    %10 = arith.addf %8, %9 : vector<8x128xf32>
    %11 = math.log %10 : vector<8x128xf32>
    %12 = arith.subf %11, %0 : vector<8x128xf32>
    %cst_8 = arith.constant 1.000000e+00 : f32
    %13 = vector.broadcast %cst_8 : f32 to vector<8x128xf32>
    %14 = arith.subf %13, %8 : vector<8x128xf32>
    %15 = arith.mulf %8, %8 : vector<8x128xf32>
    %16 = arith.mulf %14, %14 : vector<8x128xf32>
    %cst_9 = arith.constant 7.500000e-01 : f32
    %17 = vector.broadcast %cst_9 : f32 to vector<8x128xf32>
    %18 = arith.mulf %17, %15 : vector<8x128xf32>
    %cst_10 = arith.constant 0.000000e+00 : f32
    %19 = vector.broadcast %cst_10 : f32 to vector<8x128xf32>
    %20 = arith.subf %19, %12 : vector<8x128xf32>
    %21 = arith.mulf %18, %20 : vector<8x128xf32>
    %cst_11 = arith.constant 2.500000e-01 : f32
    %22 = vector.broadcast %cst_11 : f32 to vector<8x128xf32>
    %23 = arith.mulf %22, %16 : vector<8x128xf32>
    %cst_12 = arith.constant 0.000000e+00 : f32
    %24 = vector.broadcast %cst_12 : f32 to vector<8x128xf32>
    %25 = arith.subf %24, %11 : vector<8x128xf32>
    %26 = arith.mulf %23, %25 : vector<8x128xf32>
    %27 = arith.subf %26, %21 : vector<8x128xf32>
    %cst_13 = arith.constant dense<0.000000e+00> : vector<8x128xf32>
    %28 = tpu.matmul %27, %1, %cst_13 {dimension_numbers = #tpu.dot_dimension_numbers<[1], [0], [0], [1], [0, 0, 1, 1], [], []>} : vector<8x128xf32>, vector<128x128xf32>, vector<8x128xf32> -> vector<8x128xf32>
    %29 = vector.extract_strided_slice %2 {offsets = [0, 0], sizes = [8, 1], strides = [1, 1]} : vector<8x4xf32> to vector<8x1xf32>
    %30 = vector.extract_strided_slice %2 {offsets = [0, 1], sizes = [8, 1], strides = [1, 1]} : vector<8x4xf32> to vector<8x1xf32>
    %31 = vector.extract_strided_slice %2 {offsets = [0, 2], sizes = [8, 1], strides = [1, 1]} : vector<8x4xf32> to vector<8x1xf32>
    %32 = vector.extract_strided_slice %2 {offsets = [0, 3], sizes = [8, 1], strides = [1, 1]} : vector<8x4xf32> to vector<8x1xf32>
    %33 = vector.extract_strided_slice %3 {offsets = [0, 0], sizes = [1, 128], strides = [1, 1]} : vector<4x128xf32> to vector<1x128xf32>
    %34 = vector.extract_strided_slice %3 {offsets = [1, 0], sizes = [1, 128], strides = [1, 1]} : vector<4x128xf32> to vector<1x128xf32>
    %35 = vector.extract_strided_slice %3 {offsets = [2, 0], sizes = [1, 128], strides = [1, 1]} : vector<4x128xf32> to vector<1x128xf32>
    %36 = vector.extract_strided_slice %3 {offsets = [3, 0], sizes = [1, 128], strides = [1, 1]} : vector<4x128xf32> to vector<1x128xf32>
    %37 = vector.broadcast %29 : vector<8x1xf32> to vector<8x128xf32>
    %38 = vector.broadcast %33 : vector<1x128xf32> to vector<8x128xf32>
    %39 = arith.subf %37, %38 : vector<8x128xf32>
    %40 = math.absf %39 : vector<8x128xf32>
    %41 = vector.broadcast %30 : vector<8x1xf32> to vector<8x128xf32>
    %42 = vector.broadcast %34 : vector<1x128xf32> to vector<8x128xf32>
    %43 = arith.subf %41, %42 : vector<8x128xf32>
    %44 = math.absf %43 : vector<8x128xf32>
    %45 = arith.addf %40, %44 : vector<8x128xf32>
    %46 = vector.broadcast %31 : vector<8x1xf32> to vector<8x128xf32>
    %47 = vector.broadcast %35 : vector<1x128xf32> to vector<8x128xf32>
    %48 = arith.subf %46, %47 : vector<8x128xf32>
    %49 = math.absf %48 : vector<8x128xf32>
    %50 = arith.addf %45, %49 : vector<8x128xf32>
    %51 = vector.broadcast %32 : vector<8x1xf32> to vector<8x128xf32>
    %52 = vector.broadcast %36 : vector<1x128xf32> to vector<8x128xf32>
    %53 = arith.subf %51, %52 : vector<8x128xf32>
    %54 = math.absf %53 : vector<8x128xf32>
    %55 = arith.addf %50, %54 : vector<8x128xf32>
    %cst_14 = arith.constant 5.000000e-01 : f32
    %56 = vector.broadcast %cst_14 : f32 to vector<8x1xf32>
    %57 = arith.mulf %56, %31 : vector<8x1xf32>
    %58 = arith.subf %29, %57 : vector<8x1xf32>
    %cst_15 = arith.constant 5.000000e-01 : f32
    %59 = vector.broadcast %cst_15 : f32 to vector<8x1xf32>
    %60 = arith.mulf %59, %32 : vector<8x1xf32>
    %61 = arith.subf %30, %60 : vector<8x1xf32>
    %cst_16 = arith.constant 5.000000e-01 : f32
    %62 = vector.broadcast %cst_16 : f32 to vector<8x1xf32>
    %63 = arith.mulf %62, %31 : vector<8x1xf32>
    %64 = arith.addf %29, %63 : vector<8x1xf32>
    %cst_17 = arith.constant 5.000000e-01 : f32
    %65 = vector.broadcast %cst_17 : f32 to vector<8x1xf32>
    %66 = arith.mulf %65, %32 : vector<8x1xf32>
    %67 = arith.addf %30, %66 : vector<8x1xf32>
    %cst_18 = arith.constant 5.000000e-01 : f32
    %68 = vector.broadcast %cst_18 : f32 to vector<1x128xf32>
    %69 = arith.mulf %68, %35 : vector<1x128xf32>
    %70 = arith.subf %33, %69 : vector<1x128xf32>
    %cst_19 = arith.constant 5.000000e-01 : f32
    %71 = vector.broadcast %cst_19 : f32 to vector<1x128xf32>
    %72 = arith.mulf %71, %36 : vector<1x128xf32>
    %73 = arith.subf %34, %72 : vector<1x128xf32>
    %cst_20 = arith.constant 5.000000e-01 : f32
    %74 = vector.broadcast %cst_20 : f32 to vector<1x128xf32>
    %75 = arith.mulf %74, %35 : vector<1x128xf32>
    %76 = arith.addf %33, %75 : vector<1x128xf32>
    %cst_21 = arith.constant 5.000000e-01 : f32
    %77 = vector.broadcast %cst_21 : f32 to vector<1x128xf32>
    %78 = arith.mulf %77, %36 : vector<1x128xf32>
    %79 = arith.addf %34, %78 : vector<1x128xf32>
    %80 = arith.subf %64, %58 : vector<8x1xf32>
    %81 = arith.subf %67, %61 : vector<8x1xf32>
    %82 = arith.mulf %80, %81 : vector<8x1xf32>
    %83 = arith.subf %76, %70 : vector<1x128xf32>
    %84 = arith.subf %79, %73 : vector<1x128xf32>
    %85 = arith.mulf %83, %84 : vector<1x128xf32>
    %86 = vector.broadcast %64 : vector<8x1xf32> to vector<8x128xf32>
    %87 = vector.broadcast %76 : vector<1x128xf32> to vector<8x128xf32>
    %88 = arith.minimumf %86, %87 : vector<8x128xf32>
    %89 = vector.broadcast %58 : vector<8x1xf32> to vector<8x128xf32>
    %90 = vector.broadcast %70 : vector<1x128xf32> to vector<8x128xf32>
    %91 = arith.maximumf %89, %90 : vector<8x128xf32>
    %92 = arith.subf %88, %91 : vector<8x128xf32>
    %cst_22 = arith.constant 0.000000e+00 : f32
    %93 = vector.broadcast %cst_22 : f32 to vector<8x128xf32>
    %94 = arith.maximumf %92, %93 : vector<8x128xf32>
    %95 = vector.broadcast %67 : vector<8x1xf32> to vector<8x128xf32>
    %96 = vector.broadcast %79 : vector<1x128xf32> to vector<8x128xf32>
    %97 = arith.minimumf %95, %96 : vector<8x128xf32>
    %98 = vector.broadcast %61 : vector<8x1xf32> to vector<8x128xf32>
    %99 = vector.broadcast %73 : vector<1x128xf32> to vector<8x128xf32>
    %100 = arith.maximumf %98, %99 : vector<8x128xf32>
    %101 = arith.subf %97, %100 : vector<8x128xf32>
    %cst_23 = arith.constant 0.000000e+00 : f32
    %102 = vector.broadcast %cst_23 : f32 to vector<8x128xf32>
    %103 = arith.maximumf %101, %102 : vector<8x128xf32>
    %104 = arith.mulf %94, %103 : vector<8x128xf32>
    %105 = vector.broadcast %82 : vector<8x1xf32> to vector<8x128xf32>
    %106 = vector.broadcast %85 : vector<1x128xf32> to vector<8x128xf32>
    %107 = arith.addf %105, %106 : vector<8x128xf32>
    %108 = arith.subf %107, %104 : vector<8x128xf32>
    %109 = tpu.reciprocal %108 : vector<8x128xf32> -> vector<8x128xf32>
    %110 = arith.mulf %104, %109 : vector<8x128xf32>
    %111 = vector.broadcast %64 : vector<8x1xf32> to vector<8x128xf32>
    %112 = vector.broadcast %76 : vector<1x128xf32> to vector<8x128xf32>
    %113 = arith.maximumf %111, %112 : vector<8x128xf32>
    %114 = vector.broadcast %58 : vector<8x1xf32> to vector<8x128xf32>
    %115 = vector.broadcast %70 : vector<1x128xf32> to vector<8x128xf32>
    %116 = arith.minimumf %114, %115 : vector<8x128xf32>
    %117 = arith.subf %113, %116 : vector<8x128xf32>
    %cst_24 = arith.constant 0.000000e+00 : f32
    %118 = vector.broadcast %cst_24 : f32 to vector<8x128xf32>
    %119 = arith.maximumf %117, %118 : vector<8x128xf32>
    %120 = vector.broadcast %67 : vector<8x1xf32> to vector<8x128xf32>
    %121 = vector.broadcast %79 : vector<1x128xf32> to vector<8x128xf32>
    %122 = arith.maximumf %120, %121 : vector<8x128xf32>
    %123 = vector.broadcast %61 : vector<8x1xf32> to vector<8x128xf32>
    %124 = vector.broadcast %73 : vector<1x128xf32> to vector<8x128xf32>
    %125 = arith.minimumf %123, %124 : vector<8x128xf32>
    %126 = arith.subf %122, %125 : vector<8x128xf32>
    %cst_25 = arith.constant 0.000000e+00 : f32
    %127 = vector.broadcast %cst_25 : f32 to vector<8x128xf32>
    %128 = arith.maximumf %126, %127 : vector<8x128xf32>
    %129 = arith.mulf %119, %128 : vector<8x128xf32>
    %130 = arith.subf %129, %108 : vector<8x128xf32>
    %131 = tpu.reciprocal %129 : vector<8x128xf32> -> vector<8x128xf32>
    %132 = arith.mulf %130, %131 : vector<8x128xf32>
    %133 = arith.subf %110, %132 : vector<8x128xf32>
    %cst_26 = arith.constant 0.000000e+00 : f32
    %134 = vector.broadcast %cst_26 : f32 to vector<8x128xf32>
    %135 = arith.subf %134, %133 : vector<8x128xf32>
    %cst_27 = arith.constant 1.000000e+00 : f32
    %136 = vector.broadcast %cst_27 : f32 to vector<8x128xf32>
    %137 = arith.mulf %136, %55 : vector<8x128xf32>
    %cst_28 = arith.constant 1.000000e+00 : f32
    %138 = vector.broadcast %cst_28 : f32 to vector<8x128xf32>
    %139 = arith.mulf %138, %28 : vector<8x128xf32>
    %140 = arith.addf %137, %139 : vector<8x128xf32>
    %cst_29 = arith.constant 1.000000e+00 : f32
    %141 = vector.broadcast %cst_29 : f32 to vector<8x128xf32>
    %142 = arith.mulf %141, %135 : vector<8x128xf32>
    %143 = arith.addf %140, %142 : vector<8x128xf32>
    %c0_30 = arith.constant 0 : index
    %c0_31 = arith.constant 0 : index
    %144 = vector.load %arg5[%c0_30, %c0_31] : memref<8x128xf32, #tpu.memory_space<vmem>>, vector<8x128xf32>
    tpu.vector_store %arg5[%c0_30, %c0_31], %143 {strides = array<i32>} : memref<8x128xf32, #tpu.memory_space<vmem>>, vector<8x128xf32>,
    %c0_32 = arith.constant 0 : index
    %c0_33 = arith.constant 0 : index
    %145 = vector.load %arg6[%c0_32, %c0_33] : memref<8x128xf32, #tpu.memory_space<vmem>>, vector<8x128xf32>
    tpu.vector_store %arg6[%c0_32, %c0_33], %28 {strides = array<i32>} : memref<8x128xf32, #tpu.memory_space<vmem>>, vector<8x128xf32>,
    return
  }
  func.func @transform_0(%arg0: i32) -> (i32, i32) {
    %c0_i32 = arith.constant 0 : i32
    %c0_i32_0 = arith.constant 0 : i32
    return %arg0, %c0_i32 : i32, i32
  }
  func.func @transform_1(%arg0: i32) -> (i32, i32) {
    %c0_i32 = arith.constant 0 : i32
    %c0_i32_0 = arith.constant 0 : i32
    %c0_i32_1 = arith.constant 0 : i32
    return %c0_i32, %c0_i32_0 : i32, i32
  }
  func.func @transform_2(%arg0: i32) -> (i32, i32) {
    %c0_i32 = arith.constant 0 : i32
    %c0_i32_0 = arith.constant 0 : i32
    return %arg0, %c0_i32 : i32, i32
  }
  func.func @transform_3(%arg0: i32) -> (i32, i32) {
    %c0_i32 = arith.constant 0 : i32
    %c0_i32_0 = arith.constant 0 : i32
    %c0_i32_1 = arith.constant 0 : i32
    return %c0_i32, %c0_i32_0 : i32, i32
  }
  func.func @transform_4(%arg0: i32) -> (i32, i32) {
    %c0_i32 = arith.constant 0 : i32
    %c0_i32_0 = arith.constant 0 : i32
    return %arg0, %c0_i32 : i32, i32
  }
  func.func @transform_5(%arg0: i32) -> (i32, i32) {
    %c0_i32 = arith.constant 0 : i32
    %c0_i32_0 = arith.constant 0 : i32
    return %arg0, %c0_i32 : i32, i32
  }
}

</mosaic_0001>

<llo_original>
// kernel: tpu_custom_call.1
$region0: #{tpu_custom_call.1}
  #allocation0 [shape = 'u32[]', space=smem, size = 0x4, offset = 0x4, fixed_abs, tag = 'smem constant byte address 0x4 - core index']
  #allocation1 [shape = 'u32[144,128]{1,0:T(1,128)}', space=vmem, size = 0x12000, scoped, tag = 'internal scratch']
  %s0 = inlined_call_operand.vmem [shape: f32[16,128], index: 0, kind: input, shape index: {}]
  %s1 = inlined_call_operand.hbm [shape: f32[128,128], index: 1, kind: input, shape index: {}]
  %s2 = inlined_call_operand.vmem [shape: f32[16,4], index: 2, kind: input, shape index: {}]
  %s3 = inlined_call_operand.vmem [shape: f32[4,128], index: 3, kind: input, shape index: {}]
  %s4 = inlined_call_operand.hbm [shape: f32[16,128], index: 4, kind: output, shape index: {0}]
  %s5 = inlined_call_operand.hbm [shape: f32[16,128], index: 5, kind: output, shape index: {1}]
  %6 = xla_tuple %s4, %s5
  %s7 = sld [smem:[#allocation0]]
  $region61: #{tpu_custom_call.1} parent=0
    _
  %s9 = ssub.s32 1, %s7
  %s10 = scalar_select 0, %s9, %s7
  $region1: #{tpu_custom_call.1} parent=0
    #allocation2 [shape = 'u8[65536]{0}', space=vmem, size = 0x10000, scoped, tag = 'input window, operand 1, single buffered']
    #allocation3 [shape = 's32[2]{0}', space=sflag, size = 0x8, scoped, tag = 'scoped memory for tpu_custom_call.1']
    #allocation4 [shape = 's32[2]{0}', space=sflag, size = 0x8, scoped, tag = 'scoped memory for tpu_custom_call.1']
    #allocation5 [shape = 'u8[8192]{0}', space=vmem, size = 0x2000, scoped, tag = 'output window, operand 0']
    #allocation6 [shape = 'u8[8192]{0}', space=vmem, size = 0x2000, scoped, tag = 'output window, operand 1']
    #allocation7 [shape = 's32[2]{0}', space=sflag, size = 0x8, scoped, tag = 'scoped memory for tpu_custom_call.1']
    %11 = vsyncpa [#allocation3], 0
    %12 = vsyncpa [#allocation4], 0
    %s13 = scalar_lea.sflag [#allocation4], 1
    %14 = vsyncpa %s13, 0
    %15 = vsyncpa [#allocation7], 0
    %s16 = scalar_lea.sflag [#allocation7], 1
    %17 = vsyncpa %s16, 0
    loop: start=0, step=1, limit=4
    $region2: #{tpu_custom_call.1} parent=1 // loop_pre_header
      _
    $region3: #{tpu_custom_call.1} parent=1 // loop_header
      %s19 = sphi 0, %s23
      %p20 = scmp.ge.s32.totalorder %s19, 4
      %s29 = sphi 0, %s31
      %s32 = sphi 0, %s29
      %s33 = sphi 0, %s32
      %s49 = sphi 0, %s33
      %s53 = sphi 0, %s53
      %s55 = sphi 0, %s53
      %s56 = sphi 0, %s55
      %s70 = sphi 0, %s56
      %s76 = sphi 0, %s78
      %s79 = sphi 0, %s76
      %s80 = sphi 0, %s79
      %s96 = sphi 0, %s80
      %s100 = sphi 0, %s100
      %s102 = sphi 0, %s100
      %s103 = sphi 0, %s102
      %s117 = sphi 0, %s103
      %s123 = sphi 0, %s125
      %s126 = sphi 0, %s123
      %s127 = sphi 0, %s126
      %s143 = sphi 0, %s127
      %s149 = sphi 0, %s151
      %s152 = sphi 0, %s149
      %s153 = sphi 0, %s152
      %s169 = sphi 0, %s153
    $region4: #{tpu_custom_call.1} parent=1 // loop_header_branch
      %22 = sbr.rel (%p20) target = $region8
    $region5: #{tpu_custom_call.1} parent=1 // loop_body
      %s24 = ssub.s32 %s19, 1
      %s25 = ssub.s32 %s19, 2
      %s26 = sadd.s32 %s19, 1
      %s27 = ssub.s32 %s19, %s26
      %p28 = scmp.eq.s32.totalorder %s27, 0
      %s30 = sadd.s32 %s29, 1
      %s31 = scalar_select %p28, %s29, %s30
      %p34 = pneg %p28
      %p35 = scmp.eq.s32.totalorder %s19, 1
      %p36 = por %p34, %p35
      %p37 = scmp.ne.s32.totalorder %s29, %s32
      %p38 = scmp.eq.s32.totalorder %s19, 0
      %p39 = por %p37, %p38
      %p40 = scmp.ne.s32.totalorder %s29, %s32
      %p41 = scmp.eq.s32.totalorder %s24, 1
      %p42 = por %p40, %p41
      %p43 = scmp.ne.s32.totalorder %s32, %s33
      %p44 = scmp.eq.s32.totalorder %s24, 0
      %p45 = por %p43, %p44
      %p46 = scmp.ne.s32.totalorder %s32, %s33
      %p47 = scmp.eq.s32.totalorder %s25, 1
      %p48 = por %p46, %p47
      %p50 = scmp.ne.s32.totalorder %s33, %s49
      %p51 = scmp.eq.s32.totalorder %s25, 0
      %p52 = por %p50, %p51
      %s54 = sadd.s32 %s53, 1
      %p57 = scmp.eq.s32.totalorder %s19, 1
      %p58 = scmp.ne.s32.totalorder %s53, %s55
      %p59 = scmp.eq.s32.totalorder %s19, 0
      %p60 = por %p58, %p59
      %p61 = scmp.ne.s32.totalorder %s53, %s55
      %p62 = scmp.eq.s32.totalorder %s24, 1
      %p63 = por %p61, %p62
      %p64 = scmp.ne.s32.totalorder %s55, %s56
      %p65 = scmp.eq.s32.totalorder %s24, 0
      %p66 = por %p64, %p65
      %p67 = scmp.ne.s32.totalorder %s55, %s56
      %p68 = scmp.eq.s32.totalorder %s25, 1
      %p69 = por %p67, %p68
      %p71 = scmp.ne.s32.totalorder %s56, %s70
      %p72 = scmp.eq.s32.totalorder %s25, 0
      %p73 = por %p71, %p72
      %s74 = ssub.s32 %s19, %s26
      %p75 = scmp.eq.s32.totalorder %s74, 0
      %s77 = sadd.s32 %s76, 1
      %s78 = scalar_select %p75, %s76, %s77
      %p81 = pneg %p75
      %p82 = scmp.eq.s32.totalorder %s19, 1
      %p83 = por %p81, %p82
      %p84 = scmp.ne.s32.totalorder %s76, %s79
      %p85 = scmp.eq.s32.totalorder %s19, 0
      %p86 = por %p84, %p85
      %p87 = scmp.ne.s32.totalorder %s76, %s79
      %p88 = scmp.eq.s32.totalorder %s24, 1
      %p89 = por %p87, %p88
      %p90 = scmp.ne.s32.totalorder %s79, %s80
      %p91 = scmp.eq.s32.totalorder %s24, 0
      %p92 = por %p90, %p91
      %p93 = scmp.ne.s32.totalorder %s79, %s80
      %p94 = scmp.eq.s32.totalorder %s25, 1
      %p95 = por %p93, %p94
      %p97 = scmp.ne.s32.totalorder %s80, %s96
      %p98 = scmp.eq.s32.totalorder %s25, 0
      %p99 = por %p97, %p98
      %s101 = sadd.s32 %s100, 1
      %p104 = scmp.eq.s32.totalorder %s19, 1
      %p105 = scmp.ne.s32.totalorder %s100, %s102
      %p106 = scmp.eq.s32.totalorder %s19, 0
      %p107 = por %p105, %p106
      %p108 = scmp.ne.s32.totalorder %s100, %s102
      %p109 = scmp.eq.s32.totalorder %s24, 1
      %p110 = por %p108, %p109
      %p111 = scmp.ne.s32.totalorder %s102, %s103
      %p112 = scmp.eq.s32.totalorder %s24, 0
      %p113 = por %p111, %p112
      %p114 = scmp.ne.s32.totalorder %s102, %s103
      %p115 = scmp.eq.s32.totalorder %s25, 1
      %p116 = por %p114, %p115
      %p118 = scmp.ne.s32.totalorder %s103, %s117
      %p119 = scmp.eq.s32.totalorder %s25, 0
      %p120 = por %p118, %p119
      %s121 = ssub.s32 %s19, %s26
      %p122 = scmp.eq.s32.totalorder %s121, 0
      %s124 = sadd.s32 %s123, 1
      %s125 = scalar_select %p122, %s123, %s124
      %p128 = pneg %p122
      %p129 = scmp.eq.s32.totalorder %s19, 1
      %p130 = por %p128, %p129
      %p131 = scmp.ne.s32.totalorder %s123, %s126
      %p132 = scmp.eq.s32.totalorder %s19, 0
      %p133 = por %p131, %p132
      %p134 = scmp.ne.s32.totalorder %s123, %s126
      %p135 = scmp.eq.s32.totalorder %s24, 1
      %p136 = por %p134, %p135
      %p137 = scmp.ne.s32.totalorder %s126, %s127
      %p138 = scmp.eq.s32.totalorder %s24, 0
      %p139 = por %p137, %p138
      %p140 = scmp.ne.s32.totalorder %s126, %s127
      %p141 = scmp.eq.s32.totalorder %s25, 1
      %p142 = por %p140, %p141
      %p144 = scmp.ne.s32.totalorder %s127, %s143
      %p145 = scmp.eq.s32.totalorder %s25, 0
      %p146 = por %p144, %p145
      %s147 = ssub.s32 %s19, %s26
      %p148 = scmp.eq.s32.totalorder %s147, 0
      %s150 = sadd.s32 %s149, 1
      %s151 = scalar_select %p148, %s149, %s150
      %p154 = pneg %p148
      %p155 = scmp.eq.s32.totalorder %s19, 1
      %p156 = por %p154, %p155
      %p157 = scmp.ne.s32.totalorder %s149, %s152
      %p158 = scmp.eq.s32.totalorder %s19, 0
      %p159 = por %p157, %p158
      %p160 = scmp.ne.s32.totalorder %s149, %s152
      %p161 = scmp.eq.s32.totalorder %s24, 1
      %p162 = por %p160, %p161
      %p163 = scmp.ne.s32.totalorder %s152, %s153
      %p164 = scmp.eq.s32.totalorder %s24, 0
      %p165 = por %p163, %p164
      %p166 = scmp.ne.s32.totalorder %s152, %s153
      %p167 = scmp.eq.s32.totalorder %s25, 1
      %p168 = por %p166, %p167
      %p170 = scmp.ne.s32.totalorder %s153, %s169
      %p171 = scmp.eq.s32.totalorder %s25, 0
      %p172 = por %p170, %p171
      %p173 = scmp.le.s32.totalorder 1, %s19
      %p174 = scmp.lt.s32.totalorder %s19, 3
      %p175 = pnand %p173, %p174
      %p176 = pneg %p175
      // Predicated region
      $region9: #{tpu_custom_call.1} parent=5 // pred_check
        _
      $region10: #{tpu_custom_call.1} parent=5 // pred_check_branch
        %178 = sbr.rel (%p175) target = $region12
      $region11: #{tpu_custom_call.1} parent=5 // pred_region
        %s179 = ssub.s32 %s19, 1
        // Predicated region
        $region13: #{tpu_custom_call.1} parent=11 // pred_check
          %p180 = pneg %p66
        $region14: #{tpu_custom_call.1} parent=11 // pred_check_branch
          %182 = sbr.rel (%p180) target = $region16
        $region15: #{tpu_custom_call.1} parent=11 // pred_region
          %s184 = ssub.s32 2048, 2048
          %185 = vsyncadd [#allocation3], %s184
          %s186 = sshll.u32 [#allocation2], 4
          %s187 = int_to_ptr.vmem [resolvable:$true] %s186
          %192 = dma.hbm_to_vmem [thread:$0]  %s1, 2048, %s187, [#allocation3], 128, 128, 8
        $region16: #{tpu_custom_call.1} parent=11 // pred_fallthru
          _
        // Predicated region
        $region17: #{tpu_custom_call.1} parent=11 // pred_check
          %p193 = pneg %p113
        $region18: #{tpu_custom_call.1} parent=11 // pred_check_branch
          %195 = sbr.rel (%p193) target = $region20
        $region19: #{tpu_custom_call.1} parent=11 // pred_region
          _
        $region20: #{tpu_custom_call.1} parent=11 // pred_fallthru
          _
      $region12: #{tpu_custom_call.1} parent=5 // pred_fallthru
        _
      %p196 = scmp.lt.s32.totalorder %s19, 2
      // Predicated region
      $region21: #{tpu_custom_call.1} parent=5 // pred_check
        %p197 = pneg %p196
      $region22: #{tpu_custom_call.1} parent=5 // pred_check_branch
        %199 = sbr.rel (%p197) target = $region24
      $region23: #{tpu_custom_call.1} parent=5 // pred_region
        // Predicated region
        $region25: #{tpu_custom_call.1} parent=23 // pred_check
          %p200 = pneg %p39
        $region26: #{tpu_custom_call.1} parent=23 // pred_check_branch
          %202 = sbr.rel (%p200) target = $region28
        $region27: #{tpu_custom_call.1} parent=23 // pred_region
          %p203 = scmp.lt.s32.totalorder %s19, 1
          %s204 = scalar_select %p203, %s19, 1
          %s205 = smul.addr %s204, 8
          %s206 = scalar_lea.vmem %s0, %s205
        $region28: #{tpu_custom_call.1} parent=23 // pred_fallthru
          _
        // Predicated region
        $region29: #{tpu_custom_call.1} parent=23 // pred_check
          %p207 = pneg %p86
        $region30: #{tpu_custom_call.1} parent=23 // pred_check_branch
          %209 = sbr.rel (%p207) target = $region32
        $region31: #{tpu_custom_call.1} parent=23 // pred_region
          %p210 = scmp.lt.s32.totalorder %s19, 1
          %s211 = scalar_select %p210, %s19, 1
          %s212 = smul.addr %s211, 8
          %s213 = scalar_lea.vmem %s2, %s212
        $region32: #{tpu_custom_call.1} parent=23 // pred_fallthru
          _
      $region24: #{tpu_custom_call.1} parent=5 // pred_fallthru
        _
      %p214 = scmp.le.s32.totalorder 1, %s19
      %p215 = scmp.lt.s32.totalorder %s19, 3
      %p216 = pnand %p214, %p215
      %p217 = pneg %p216
      // Predicated region
      $region33: #{tpu_custom_call.1} parent=5 // pred_check
        _
      $region34: #{tpu_custom_call.1} parent=5 // pred_check_branch
        %219 = sbr.rel (%p216) target = $region36
      $region35: #{tpu_custom_call.1} parent=5 // pred_region
        %s220 = ssub.s32 %s19, 1
        // Predicated region
        $region37: #{tpu_custom_call.1} parent=35 // pred_check
          %p221 = pneg %p66
        $region38: #{tpu_custom_call.1} parent=35 // pred_check_branch
          %223 = sbr.rel (%p221) target = $region40
        $region39: #{tpu_custom_call.1} parent=35 // pred_region
          %224 = dma.done [#allocation3], 2048
        $region40: #{tpu_custom_call.1} parent=35 // pred_fallthru
          _
        %p225 = scmp.lt.s32.totalorder %s24, 1
        %s226 = scalar_select %p225, %s24, 1
        %s227 = smul.addr %s226, 8
        %s228 = scalar_lea.vmem %s0, %s227
        %p229 = pneg %p45
        %p230 = pneg %p42
        %p231 = pneg %p66
        %p232 = pneg %p63
        %p233 = scmp.lt.s32.totalorder %s24, 1
        %s234 = scalar_select %p233, %s24, 1
        %s235 = smul.addr %s234, 8
        %s236 = scalar_lea.vmem %s2, %s235
        %p237 = pneg %p92
        %p238 = pneg %p89
        %p239 = pneg %p113
        %p240 = pneg %p110
        %p241 = pneg %p139
        %p242 = pneg %p136
        %s243 = sand.u32 %s126, 1
        %s244 = scalar_lea.sflag [#allocation4], %s243
        %s245 = sand.u32 %s126, 1
        %s246 = smul.addr %s245, 8
        %s247 = scalar_lea.vmem [#allocation5], %s246
        %p248 = pneg %p165
        %p249 = pneg %p162
        %s250 = sand.u32 %s152, 1
        %s251 = scalar_lea.sflag [#allocation7], %s250
        %s252 = sand.u32 %s152, 1
        %s253 = smul.addr %s252, 8
        %s254 = scalar_lea.vmem [#allocation6], %s253
        %p255 = scmp.lt.s32.totalorder %s24, 1
        %s256 = scalar_select %p255, %s24, 1
        %s257 = smul.addr %s256, 8
        %s258 = scalar_lea.vmem %s0, %s257
        %p259 = scmp.lt.s32.totalorder %s24, 1
        %s260 = scalar_select %p259, %s24, 1
        %s261 = smul.addr %s260, 8
        %s262 = scalar_lea.vmem %s2, %s261
        %v263 = vld [vmem:[%s258] sm:$0xff]
        %v264 = vld [vmem:[#allocation2] sm:$0xff]
        %v265 = vld [vmem:[#allocation2 + $0x8] sm:$0xff]
        %v266 = vld [vmem:[#allocation2 + $0x10] sm:$0xff]
        %v267 = vld [vmem:[#allocation2 + $0x18] sm:$0xff]
        %v268 = vld [vmem:[#allocation2 + $0x20] sm:$0xff]
        %v269 = vld [vmem:[#allocation2 + $0x28] sm:$0xff]
        %v270 = vld [vmem:[#allocation2 + $0x30] sm:$0xff]
        %v271 = vld [vmem:[#allocation2 + $0x38] sm:$0xff]
        %v272 = vld [vmem:[#allocation2 + $0x40] sm:$0xff]
        %v273 = vld [vmem:[#allocation2 + $0x48] sm:$0xff]
        %v274 = vld [vmem:[#allocation2 + $0x50] sm:$0xff]
        %v275 = vld [vmem:[#allocation2 + $0x58] sm:$0xff]
        %v276 = vld [vmem:[#allocation2 + $0x60] sm:$0xff]
        %v277 = vld [vmem:[#allocation2 + $0x68] sm:$0xff]
        %v278 = vld [vmem:[#allocation2 + $0x70] sm:$0xff]
        %v279 = vld [vmem:[#allocation2 + $0x78] sm:$0xff]
        %v280 = vld [vmem:[%s262] sm:$0xff]
        %v281 = vld [vmem:[%s3] sm:$0xf]
        %v282 = vxor.u32 %v263, 2147483648
        %v283 = vmul.f32 %v282, 1.442695
        %v284 = vpow.pop %v283
        %v285 = vadd.f32 %v284, 1.0
        %v286 = vrcp.pop %v285
        %v287 = vmul.f32 1.0, %v286
        %v288 = vadd.f32 %v287, 1e-08
        %v289 = vlog2.pop %v288
        %v290 = vmul.f32 %v289, 0.6931472
        %v291 = vsub.f32 %v290, %v263
        %v292 = vsub.f32 1.0, %v287
        %v293 = vmul.f32 %v287, %v287
        %v294 = vmul.f32 %v292, %v292
        %v295 = vmul.f32 %v293, 0.75
        %v296 = vsub.f32 0.0, %v291
        %v297 = vmul.f32 %v295, %v296
        %v298 = vmul.f32 %v294, 0.25
        %v299 = vsub.f32 0.0, %v290
        %v300 = vmul.f32 %v298, %v299
        %v301 = vsub.f32 %v300, %v297
        %302 = vmatprep.subr.mxu0 0.0
        %303 = vmatpush1.msra.mxu0 %v279
        %304 = vmatprep.subr.mxu0 0.0
        %305 = vmatpush1.msra.mxu0 %v278
        %306 = vmatprep.subr.mxu0 0.0
        %307 = vmatpush1.msra.mxu0 %v277
        %308 = vmatprep.subr.mxu0 0.0
        %309 = vmatpush1.msra.mxu0 %v276
        %310 = vmatprep.subr.mxu0 0.0
        %311 = vmatpush1.msra.mxu0 %v275
        %312 = vmatprep.subr.mxu0 0.0
        %313 = vmatpush1.msra.mxu0 %v274
        %314 = vmatprep.subr.mxu0 0.0
        %315 = vmatpush1.msra.mxu0 %v273
        %316 = vmatprep.subr.mxu0 0.0
        %317 = vmatpush1.msra.mxu0 %v272
        %318 = vmatprep.subr.mxu0 0.0
        %319 = vmatpush1.msra.mxu0 %v271
        %320 = vmatprep.subr.mxu0 0.0
        %321 = vmatpush1.msra.mxu0 %v270
        %322 = vmatprep.subr.mxu0 0.0
        %323 = vmatpush1.msra.mxu0 %v269
        %324 = vmatprep.subr.mxu0 0.0
        %325 = vmatpush1.msra.mxu0 %v268
        %326 = vmatprep.subr.mxu0 0.0
        %327 = vmatpush1.msra.mxu0 %v267
        %328 = vmatprep.subr.mxu0 0.0
        %329 = vmatpush1.msra.mxu0 %v266
        %330 = vmatprep.subr.mxu0 0.0
        %331 = vmatpush1.msra.mxu0 %v265
        %332 = vmatprep.subr.mxu0 0.0
        %333 = vmatpush1.msra.mxu0 %v264
        %334 = vmatprep.subr.mxu0 0.0
        %335 = vmatpush2.msra.mxu0 0.0
        %336 = vmatprep.subr.mxu0 0.0
        %337 = vmatpush2.msra.mxu0 0.0
        %338 = vmatprep.subr.mxu0 0.0
        %339 = vmatpush2.msra.mxu0 0.0
        %340 = vmatprep.subr.mxu0 0.0
        %341 = vmatpush2.msra.mxu0 0.0
        %342 = vmatprep.subr.mxu0 0.0
        %343 = vmatpush2.msra.mxu0 0.0
        %344 = vmatprep.subr.mxu0 0.0
        %345 = vmatpush2.msra.mxu0 0.0
        %346 = vmatprep.subr.mxu0 0.0
        %347 = vmatpush2.msra.mxu0 0.0
        %348 = vmatprep.subr.mxu0 0.0
        %349 = vmatpush2.msra.mxu0 0.0
        %350 = vmatprep.subr.mxu0 0.0
        %351 = vmatpush2.msra.mxu0 0.0
        %352 = vmatprep.subr.mxu0 0.0
        %353 = vmatpush2.msra.mxu0 0.0
        %354 = vmatprep.subr.mxu0 0.0
        %355 = vmatpush2.msra.mxu0 0.0
        %356 = vmatprep.subr.mxu0 0.0
        %357 = vmatpush2.msra.mxu0 0.0
        %358 = vmatprep.subr.mxu0 0.0
        %359 = vmatpush2.msra.mxu0 0.0
        %360 = vmatprep.subr.mxu0 0.0
        %361 = vmatpush2.msra.mxu0 0.0
        %362 = vmatprep.subr.mxu0 0.0
        %363 = vmatpush2.msra.mxu0 0.0
        %364 = vmatprep.subr.mxu0 0.0
        %365 = vmatpush2.msra.mxu0 0.0
        %366 = vmatprep.mubr.f32.mxu0 0.0
        %367 = vmatmul.mubr.f32.gmra.mxu0 %v301
        %v368 = vpop.f32.mrf.mxu0
        %v369 = vadd.f32 0.0, %v368
        %v370 = vpop.f32.mrf.mxu0
        %371 = vdwg.mxu0
        %373 = vset.pattern.permute.xlu0 0
        %374 = vperm.xlu0 %373, %v280
        %v375 = vpop.permute.xlu0 %374
        %v377 = vlaneseq
        %v378 = vshrl.u32 %v377, 7
        %v379 = vsub.s32 0, %v378
        %v380 = vrot.slane %v281, %v379
        %v381 = vsub.f32 %v375, %v380
        %v382 = vand.u32 2147483647, %v381
        %383 = vset.pattern.permute.xlu0 1
        %384 = vperm.xlu0 %383, %v280
        %v385 = vpop.permute.xlu0 %384
        %v387 = vlaneseq
        %v388 = vshrl.u32 %v387, 7
        %v389 = vsub.s32 1, %v388
        %v390 = vrot.slane %v281, %v389
        %v391 = vsub.f32 %v385, %v390
        %v392 = vand.u32 2147483647, %v391
        %v393 = vadd.f32 %v382, %v392
        %394 = vset.pattern.permute.xlu0 2
        %395 = vperm.xlu0 %394, %v280
        %v396 = vpop.permute.xlu0 %395
        %v398 = vlaneseq
        %v399 = vshrl.u32 %v398, 7
        %v400 = vsub.s32 2, %v399
        %v401 = vrot.slane %v281, %v400
        %v402 = vsub.f32 %v396, %v401
        %v403 = vand.u32 2147483647, %v402
        %v404 = vadd.f32 %v393, %v403
        %405 = vset.pattern.permute.xlu0 3
        %406 = vperm.xlu0 %405, %v280
        %v407 = vpop.permute.xlu0 %406
        %v409 = vlaneseq
        %v410 = vshrl.u32 %v409, 7
        %v411 = vsub.s32 3, %v410
        %v412 = vrot.slane %v281, %v411
        %v413 = vsub.f32 %v407, %v412
        %v414 = vand.u32 2147483647, %v413
        %v415 = vadd.f32 %v404, %v414
        %v416 = vmul.f32 %v280, 0.5
        %418 = vrot.lane.b32.xlu0 %v416, 126
        %v419 = vpop.permute.xlu0 %418
        %v421 = vsub.f32 %v280, %v419
        %v422 = vadd.f32 %v280, %v419
        %v423 = vmul.f32 %v281, 0.5
        %v425 = vrot.slane %v423, 2
        %v427 = vsub.f32 %v281, %v425
        %v428 = vadd.f32 %v281, %v425
        %v429 = vsub.f32 %v422, %v421
        %431 = vrot.lane.b32.xlu0 %v429, 127
        %v432 = vpop.permute.xlu0 %431
        %v434 = vmul.f32 %v429, %v432
        %v435 = vsub.f32 %v428, %v427
        %v437 = vrot.slane %v435, 1
        %v439 = vmul.f32 %v435, %v437
        %441 = vset.pattern.permute.xlu0 0
        %442 = vperm.xlu0 %441, %v422
        %v443 = vpop.permute.xlu0 %442
        %v445 = vlaneseq
        %v446 = vshrl.u32 %v445, 7
        %v447 = vsub.s32 0, %v446
        %v448 = vrot.slane %v428, %v447
        %v449 = vmin.f32 %v443, %v448
        %451 = vset.pattern.permute.xlu0 0
        %452 = vperm.xlu0 %451, %v421
        %v453 = vpop.permute.xlu0 %452
        %v455 = vlaneseq
        %v456 = vshrl.u32 %v455, 7
        %v457 = vsub.s32 0, %v456
        %v458 = vrot.slane %v427, %v457
        %v459 = vmax.f32 %v453, %v458
        %v460 = vsub.f32 %v449, %v459
        %v461 = vmax.f32 %v460, 0.0
        %462 = vset.pattern.permute.xlu0 1
        %463 = vperm.xlu0 %462, %v422
        %v464 = vpop.permute.xlu0 %463
        %v466 = vlaneseq
        %v467 = vshrl.u32 %v466, 7
        %v468 = vsub.s32 1, %v467
        %v469 = vrot.slane %v428, %v468
        %v470 = vmin.f32 %v464, %v469
        %471 = vset.pattern.permute.xlu0 1
        %472 = vperm.xlu0 %471, %v421
        %v473 = vpop.permute.xlu0 %472
        %v475 = vlaneseq
        %v476 = vshrl.u32 %v475, 7
        %v477 = vsub.s32 1, %v476
        %v478 = vrot.slane %v427, %v477
        %v479 = vmax.f32 %v473, %v478
        %v480 = vsub.f32 %v470, %v479
        %v481 = vmax.f32 %v480, 0.0
        %v482 = vmul.f32 %v461, %v481
        %484 = vset.pattern.permute.xlu0 0
        %485 = vperm.xlu0 %484, %v434
        %v486 = vpop.permute.xlu0 %485
        %v488 = vlaneseq
        %v489 = vshrl.u32 %v488, 7
        %v490 = vsub.s32 0, %v489
        %v491 = vrot.slane %v439, %v490
        %v492 = vadd.f32 %v486, %v491
        %v493 = vsub.f32 %v492, %v482
        %v494 = vrcp.pop %v493
        %v495 = vmul.f32 %v482, %v494
        %v496 = vmax.f32 %v443, %v448
        %v497 = vmin.f32 %v453, %v458
        %v498 = vsub.f32 %v496, %v497
        %v499 = vmax.f32 %v498, 0.0
        %v500 = vmax.f32 %v464, %v469
        %v501 = vmin.f32 %v473, %v478
        %v502 = vsub.f32 %v500, %v501
        %v503 = vmax.f32 %v502, 0.0
        %v504 = vmul.f32 %v499, %v503
        %v505 = vsub.f32 %v504, %v493
        %v506 = vrcp.pop %v504
        %v507 = vmul.f32 %v505, %v506
        %v508 = vsub.f32 %v495, %v507
        %v509 = vsub.f32 0.0, %v508
        %v510 = vadd.f32 %v415, %v369
        %v511 = vadd.f32 %v510, %v509
        %512 = vst [vmem:[%s247] sm:$0xff] %v511
        %513 = vst [vmem:[%s254] sm:$0xff] %v369
        %s514 = sand.u32 %s126, 1
        %s515 = scalar_lea.sflag [#allocation4], %s514
        %s516 = sand.u32 %s126, 1
        %s517 = smul.addr %s516, 8
        %s518 = scalar_lea.vmem [#allocation5], %s517
        %s519 = sand.u32 %s152, 1
        %s520 = scalar_lea.sflag [#allocation7], %s519
        %s521 = sand.u32 %s152, 1
        %s522 = smul.addr %s521, 8
        %s523 = scalar_lea.vmem [#allocation6], %s522
        // Predicated region
        $region41: #{tpu_custom_call.1} parent=35 // pred_check
          %p524 = pneg %p136
        $region42: #{tpu_custom_call.1} parent=35 // pred_check_branch
          %526 = sbr.rel (%p524) target = $region44
        $region43: #{tpu_custom_call.1} parent=35 // pred_region
          %s528 = ssub.s32 128, 128
          %529 = vsyncadd %s515, %s528
          %s530 = smul.addr %s24, 128
          %s531 = scalar_lea.hbm %s4, %s530
          %s533 = sshll.u32 %s518, 4
          %s534 = int_to_ptr.vmem [resolvable:$true] %s533
          %536 = dma.vmem_to_hbm [thread:$0]  %s534, 128, %s531, %s515
        $region44: #{tpu_custom_call.1} parent=35 // pred_fallthru
          _
        // Predicated region
        $region45: #{tpu_custom_call.1} parent=35 // pred_check
          %p537 = pneg %p162
        $region46: #{tpu_custom_call.1} parent=35 // pred_check_branch
          %539 = sbr.rel (%p537) target = $region48
        $region47: #{tpu_custom_call.1} parent=35 // pred_region
          %s541 = ssub.s32 128, 128
          %542 = vsyncadd %s520, %s541
          %s543 = smul.addr %s24, 128
          %s544 = scalar_lea.hbm %s5, %s543
          %s546 = sshll.u32 %s523, 4
          %s547 = int_to_ptr.vmem [resolvable:$true] %s546
          %549 = dma.vmem_to_hbm [thread:$0]  %s547, 128, %s544, %s520
        $region48: #{tpu_custom_call.1} parent=35 // pred_fallthru
          _
      $region36: #{tpu_custom_call.1} parent=5 // pred_fallthru
        _
      %p550 = scmp.le.s32.totalorder 2, %s19
      // Predicated region
      $region49: #{tpu_custom_call.1} parent=5 // pred_check
        %p551 = pneg %p550
      $region50: #{tpu_custom_call.1} parent=5 // pred_check_branch
        %553 = sbr.rel (%p551) target = $region52
      $region51: #{tpu_custom_call.1} parent=5 // pred_region
        %s554 = ssub.s32 %s19, 2
        // Predicated region
        $region53: #{tpu_custom_call.1} parent=51 // pred_check
          %p555 = pneg %p142
        $region54: #{tpu_custom_call.1} parent=51 // pred_check_branch
          %557 = sbr.rel (%p555) target = $region56
        $region55: #{tpu_custom_call.1} parent=51 // pred_region
          %s558 = sand.u32 %s127, 1
          %s559 = scalar_lea.sflag [#allocation4], %s558
          %s560 = sand.u32 %s127, 1
          %s561 = smul.addr %s560, 8
          %s562 = scalar_lea.vmem [#allocation5], %s561
          %563 = dma.done %s559, 128
        $region56: #{tpu_custom_call.1} parent=51 // pred_fallthru
          _
        // Predicated region
        $region57: #{tpu_custom_call.1} parent=51 // pred_check
          %p564 = pneg %p168
        $region58: #{tpu_custom_call.1} parent=51 // pred_check_branch
          %566 = sbr.rel (%p564) target = $region60
        $region59: #{tpu_custom_call.1} parent=51 // pred_region
          %s567 = sand.u32 %s153, 1
          %s568 = scalar_lea.sflag [#allocation7], %s567
          %s569 = sand.u32 %s153, 1
          %s570 = smul.addr %s569, 8
          %s571 = scalar_lea.vmem [#allocation6], %s570
          %572 = dma.done %s568, 128
        $region60: #{tpu_custom_call.1} parent=51 // pred_fallthru
          _
      $region52: #{tpu_custom_call.1} parent=5 // pred_fallthru
        _
    $region6: #{tpu_custom_call.1} parent=1 // loop_footer
      %s23 = sadd.s32 1, %s19
    $region7: #{tpu_custom_call.1} parent=1 // loop_footer_branch
      %18 = sbr.rel target = $region3
    $region8: #{tpu_custom_call.1} parent=1 // loop_exit
      _
    %573 = vsyncpa [#allocation3], 1
    %s574 = scalar_lea.sflag [#allocation3], 1
    %575 = vsyncpa %s574, 1
    %576 = vsyncpa [#allocation4], 1
    %s577 = scalar_lea.sflag [#allocation4], 1
    %578 = vsyncpa %s577, 1
    %579 = vsyncpa [#allocation7], 1
    %s580 = scalar_lea.sflag [#allocation7], 1
    %581 = vsyncpa %s580, 1

</llo_original>
